<compile_context>
chip_gen: v7x
topology: tpu7x:2x2x1
jax: 0.10.0
libtpu: 0.0.40
codegen_flags: <defaults>
</compile_context>

<pallas_src>
import jax
import jax.numpy as jnp
import numpy as np
from jax.experimental import pallas as pl
from jax.experimental.pallas import tpu as pltpu


def _round_up(x, m):
    return ((x + m - 1) // m) * m


# --------------------------------------------------------------------------
# One-time probe of pltpu.roll's rotation-direction convention (tiny (8,128)
# kernel, cached).  Called eagerly from the wrapper (outside any jit) so the
# 3x3 tap shifts are correct regardless of the lowering convention.
# --------------------------------------------------------------------------
_ROLL_LIKE_JNP = None


def _roll_matches_jnp_roll():
    global _ROLL_LIKE_JNP
    if _ROLL_LIKE_JNP is None:
        def probe(x_ref, o_ref):
            o_ref[...] = pltpu.roll(x_ref[...], 1, axis=1)

        x = jnp.broadcast_to(jnp.arange(128, dtype=jnp.float32), (8, 128))
        y = pl.pallas_call(
            probe, out_shape=jax.ShapeDtypeStruct((8, 128), jnp.float32))(x)
        # jnp.roll convention: result[j] = x[j - 1]  ->  result[0] == 127
        _ROLL_LIKE_JNP = bool(y[0, 0] == 127.0)
    return _ROLL_LIKE_JNP


# --------------------------------------------------------------------------
# Fused DenseBlock kernel (built per static config).
# --------------------------------------------------------------------------
def _make_dense_block_kernel(N, H, W, k0, k, L, *, roll_like_jnp, eps=1e-5):
    HW = H * W
    M = N * HW
    k_pad = _round_up(k, 8)
    k0_pad = _round_up(k0, 8)
    Cmid = 4 * k
    Cmid_pad = _round_up(Cmid, 8)
    inv_m = 1.0 / float(M)
    x_slot = (L - 1) * k_pad          # row offset of x inside the concat buffer

    def lane_shift(y, d):
        # z[:, m] = y[:, m + d]; wrap-around lanes are zeroed by the tap masks,
        # so a modular lane rotate (XLU) is sufficient.
        if d == 0:
            return y
        amount = (-d) % M if roll_like_jnp else d % M
        return pltpu.roll(y, amount, axis=1)

    def bn_relu(y, gamma, beta):
        # BatchNorm2d with training-mode batch stats (biased variance),
        # centered second moment (no E[y^2]-E[y]^2 cancellation), then ReLU.
        mean = jnp.sum(y, axis=1, keepdims=True) * inv_m
        diff = y - mean
        var = jnp.sum(diff * diff, axis=1, keepdims=True) * inv_m
        scale = gamma * jax.lax.rsqrt(var + eps)
        return jnp.maximum(diff * scale + beta, 0.0)

    def kernel(x_ref, masks_ref, w1_ref, w2_ref, gb_ref, out_ref, scr_ref):
        # scr_ref rows (channel-major concat buffer, all slices 8-aligned):
        #   [ f_{L-1} | ... | f_1 | x | f_0 ], each slot padded to k_pad/k0_pad.
        # lanes: image n occupies [n*HW, (n+1)*HW), m = n*HW + h*W + w.

        # Scatter the (channel-padded) input: pure lane-chunk VMEM copies,
        # no host-side NCHW transpose.
        for n in range(N):
            scr_ref[x_slot:x_slot + k0_pad, n * HW:(n + 1) * HW] = x_ref[n]

        for li in range(L):
            cin_pad = k0_pad + li * k_pad
            in_start = x_slot if li == 0 else (L - li) * k_pad
            f_start = x_slot + k0_pad if li == 0 else (L - 1 - li) * k_pad

            gbl = gb_ref[li]                            # (Cmid_pad + k_pad, 2)
            g1, b1 = gbl[:Cmid_pad, 0:1], gbl[:Cmid_pad, 1:2]
            g2, b2 = gbl[Cmid_pad:, 0:1], gbl[Cmid_pad:, 1:2]

            # ---- 1x1 conv: single MXU matmul over the live concat rows -----
            w1 = w1_ref[li * Cmid_pad:(li + 1) * Cmid_pad, :cin_pad]
            y1 = jnp.dot(w1, scr_ref[in_start:in_start + cin_pad, :],
                         preferred_element_type=jnp.float32)    # (Cmid_pad, M)
            y1 = bn_relu(y1, g1, b1)

            # ---- 3x3 conv (pad 1): ONE stacked matmul for all 9 taps, then
            #      shift + mask the small (k_pad, M) OUTPUT slabs, accumulate.
            w2 = w2_ref[li * 9 * k_pad:(li + 1) * 9 * k_pad, :]
            big = jnp.dot(w2, y1,
                          preferred_element_type=jnp.float32)   # (9*k_pad, M)
            acc = None
            for kh in range(3):
                for kw in range(3):
                    t = kh * 3 + kw
                    d = (kh - 1) * W + (kw - 1)
                    p = lane_shift(big[t * k_pad:(t + 1) * k_pad, :], d)
                    term = p * masks_ref[t:t + 1, :]
                    acc = term if acc is None else acc + term
            y2 = bn_relu(acc, g2, b2)                           # (k_pad, M)

            scr_ref[f_start:f_start + k_pad, :] = y2

        # Emit the consumer's (N, C, H*W) layout directly (free reshape to
        # NCHW outside) -- no out-of-kernel HBM transpose pass.
        for n in range(N):
            out_ref[n] = scr_ref[:, n * HW:(n + 1) * HW]

    return kernel


# --------------------------------------------------------------------------
# Wrapper: parameter packing + pallas_call.
# --------------------------------------------------------------------------
def dense_block_forward(x_nchw, params_list, eps=1e-5):
    """DenseBlock forward. x_nchw: (N, k0, H, W) -> (N, k0 + L*k, H, W)."""
    N, k0, H, W = map(int, x_nchw.shape)
    L = len(params_list)
    k = int(params_list[0]["w2_t"].shape[0])
    Cmid = int(params_list[0]["w1_t"].shape[0])            # == 4 * k
    HW = H * W
    M = N * HW

    k_pad = _round_up(k, 8)
    k0_pad = _round_up(k0, 8)
    Cmid_pad = _round_up(Cmid, 8)
    Ctot_pad = L * k_pad + k0_pad
    max_cin_pad = k0_pad + (L - 1) * k_pad
    f32 = jnp.float32

    # ---- input: NCHW -> (N, k0_pad, H*W): reshape + zero channel-pad only.
    x_r = x_nchw.astype(f32).reshape(N, k0, HW)
    if k0_pad == k0:
        x_in = x_r
    else:
        x_in = jnp.zeros((N, k0_pad, HW), f32).at[:, :k0, :].set(x_r)

    # ---- 3x3 tap-validity masks, host-precomputed, sublane-padded to 16 rows.
    hh, ww = np.arange(HW) // W, np.arange(HW) % W
    mask_np = np.zeros((16, M), np.float32)
    for kh in range(3):
        for kw in range(3):
            dh, dw = kh - 1, kw - 1
            ok = ((hh + dh >= 0) & (hh + dh < H) &
                  (ww + dw >= 0) & (ww + dw < W))
            mask_np[kh * 3 + kw] = np.tile(ok.astype(np.float32), N)
    masks = jnp.asarray(mask_np)

    # ---- 1x1 weights: one (L*Cmid_pad, max_cin_pad) stack.  Each layer's real
    #      columns sit at the padded positions of its concat-row window
    #      ([f_{li-1}|..|f_1|x|f_0]); only the first cin_pad_li columns are
    #      ever read -> no wasted MXU MACs, no dependence on a zero-init.
    w1_all = jnp.zeros((L * Cmid_pad, max_cin_pad), f32)
    for li, p in enumerate(params_list):
        cin = k0 + li * k
        w1 = p["w1_t"].astype(f32).reshape(Cmid, cin)
        r0 = li * Cmid_pad
        if li == 0:
            w1_all = w1_all.at[r0:r0 + Cmid, :k0].set(w1)
        else:
            for j in range(li - 1):                        # f_{li-1} ... f_1
                w1_all = w1_all.at[r0:r0 + Cmid,
                                   j * k_pad:j * k_pad + k].set(
                                       w1[:, j * k:(j + 1) * k])
            xc = (li - 1) * k_pad                          # x
            w1_all = w1_all.at[r0:r0 + Cmid, xc:xc + k0].set(
                w1[:, (li - 1) * k:(li - 1) * k + k0])
            fc = xc + k0_pad                               # f_0
            w1_all = w1_all.at[r0:r0 + Cmid, fc:fc + k].set(
                w1[:, (li - 1) * k + k0:(li - 1) * k + k0 + k])

    # ---- 3x3 weights: one (L*9*k_pad, Cmid_pad) tap-major stack (t = kh*3+kw).
    w2_all = jnp.zeros((L * 9 * k_pad, Cmid_pad), f32)
    for li, p in enumerate(params_list):
        taps = jnp.transpose(p["w2_t"].astype(f32),
                             (2, 3, 0, 1)).reshape(9, k, Cmid)
        taps_p = jnp.zeros((9, k_pad, Cmid_pad), f32).at[:, :k, :Cmid].set(taps)
        w2_all = w2_all.at[li * 9 * k_pad:(li + 1) * 9 * k_pad, :].set(
            taps_p.reshape(9 * k_pad, Cmid_pad))

    # ---- packed BN affine params: (L, Cmid_pad + k_pad, 2) = [gamma | beta];
    #      pad channels get gamma = beta = 0 so padded rows stay exactly zero.
    gb = jnp.zeros((L, Cmid_pad + k_pad, 2), f32)
    for li, p in enumerate(params_list):
        gb = gb.at[li, :Cmid, 0].set(p["g1"].astype(f32))
        gb = gb.at[li, :Cmid, 1].set(p["b1"].astype(f32))
        gb = gb.at[li, Cmid_pad:Cmid_pad + k, 0].set(p["g2"].astype(f32))
        gb = gb.at[li, Cmid_pad:Cmid_pad + k, 1].set(p["b2"].astype(f32))

    # ---- VMEM budget from the actual buffer sizes (single-buffered: no grid).
    def vreg_bytes(shape, itemsize=4):
        s = (1, 1) + tuple(int(d) for d in shape)
        lead = 1
        for d in s[:-2]:
            lead *= d
        return lead * _round_up(s[-2], 8) * _round_up(s[-1], 128) * itemsize

    live = [x_in.shape, masks.shape, w1_all.shape, w2_all.shape, gb.shape,
            (N, Ctot_pad, HW), (Ctot_pad, M),                 # output, scratch
            (9 * k_pad, M), (Cmid_pad, M), (k_pad, M)]        # largest temps
    need = sum(vreg_bytes(s) for s in live)
    # headroom, capped at 64 MiB so the same setting also fits v7x VMEM.
    vmem_limit = int(min(max(2 * need + (4 << 20), 16 << 20), 64 << 20))

    kernel = _make_dense_block_kernel(
        N, H, W, k0, k, L, roll_like_jnp=_roll_matches_jnp_roll(), eps=eps)

    # No grid / no GridSpec: every operand is a whole-array, single-buffered
    # VMEM block (half the footprint of a double-buffered grid=(1,) pipeline).
    out_padded = pl.pallas_call(
        kernel,
        out_shape=jax.ShapeDtypeStruct((N, Ctot_pad, HW), f32),
        scratch_shapes=[pltpu.VMEM((Ctot_pad, M), f32)],
        compiler_params=pltpu.CompilerParams(vmem_limit_bytes=vmem_limit),
    )(x_in, masks, w1_all, w2_all, gb)

    # ---- drop the alignment padding (identity when k, k0 are multiples of 8)
    #      and reshape to NCHW (a free reshape: no transpose).
    x0 = (L - 1) * k_pad
    if k_pad == k and k0_pad == k0:
        out = out_padded
    else:
        parts = [out_padded[:, (L - 1 - j) * k_pad:(L - 1 - j) * k_pad + k, :]
                 for j in range(L - 1, 0, -1)]                # f_{L-1} .. f_1
        parts.append(out_padded[:, x0:x0 + k0, :])            # x
        parts.append(out_padded[:, x0 + k0_pad:x0 + k0_pad + k, :])   # f_0
        out = jnp.concatenate(parts, axis=1)
    return out.reshape(N, k0 + L * k, H, W)


# --------------------------------------------------------------------------
# Pure-JAX reference of the PyTorch module (for a numeric cross-check).
# --------------------------------------------------------------------------
def _ref_conv(x, w, padding):
    return jax.lax.conv_general_dilated(
        x, w, window_strides=(1, 1), padding=padding,
        dimension_numbers=("NCHW", "OIHW", "NCHW"),
        precision=jax.lax.Precision.HIGHEST)


def _ref_bn_relu(y, gamma, beta, eps=1e-5):
    mean = jnp.mean(y, axis=(0, 2, 3), keepdims=True)
    var = jnp.mean(jnp.square(y - mean), axis=(0, 2, 3), keepdims=True)
    yhat = (y - mean) / jnp.sqrt(var + eps)
    return jnp.maximum(yhat * gamma.reshape(1, -1, 1, 1)
                       + beta.reshape(1, -1, 1, 1), 0.0)


def dense_block_reference(x, params_list, eps=1e-5):
    def layer(inp, p):
        y = _ref_bn_relu(_ref_conv(inp, p["w1_t"], "VALID"),
                         p["g1"], p["b1"], eps)
        return _ref_bn_relu(_ref_conv(y, p["w2_t"], ((1, 1), (1, 1))),
                            p["g2"], p["b2"], eps)

    feature = layer(x, params_list[0])
    out = jnp.concatenate((x, feature), axis=1)
    for i in range(1, len(params_list)):
        feature = layer(out, params_list[i])
        out = jnp.concatenate((feature, out), axis=1)
    return out


def init_params(key, k0, num_layers, k):
    """Deterministic synthetic parameters in PyTorch layout."""
    params = []
    for i in range(num_layers):
        cin = k0 + i * k
        key, k1, k2 = jax.random.split(key, 3)
        params.append(dict(
            w1_t=jax.random.normal(k1, (4 * k, cin, 1, 1), jnp.float32) * 0.1,
            w2_t=jax.random.normal(k2, (k, 4 * k, 3, 3), jnp.float32) * 0.1,
            g1=jnp.ones((4 * k,), jnp.float32),
            b1=jnp.zeros((4 * k,), jnp.float32),
            g2=jnp.ones((k,), jnp.float32),
            b2=jnp.zeros((k,), jnp.float32),
        ))
    return params


if __name__ == "__main__":
    key = jax.random.PRNGKey(0)
    k_x, k_w = jax.random.split(key)

    # small config: input_channels=4, num_layers=3, growth_rate=4
    N, k0, H, W = 2, 4, 16, 16
    num_layers, growth = 3, 4

    x = jax.random.normal(k_x, (N, k0, H, W), jnp.float32)   # NCHW, as PyTorch
    params = init_params(k_w, k0, num_layers, growth)

    out = dense_block_forward(x, params)
    out = jax.block_until_ready(out)

    expected_c = k0 + num_layers * growth
    assert out.shape == (N, expected_c, H, W), out.shape
    assert bool(jnp.all(jnp.isfinite(out)))

    # numeric cross-check against the pure-JAX reference of the PyTorch module
    ref = dense_block_reference(x, params)
    max_err = float(jnp.max(jnp.abs(out - ref)))
    assert max_err < 5e-2, f"mismatch vs reference: max abs err = {max_err}"

    print("KERNEL_OK")
</pallas_src>

<mosaic_0001>
module attributes {stable_mosaic.version = 11 : i64} {
  func.func @probe(%arg0: memref<8x128xf32, #tpu.memory_space<vmem>>, %arg1: memref<8x128xf32, #tpu.memory_space<vmem>>) attributes {dimension_semantics = [], scalar_prefetch = 0 : i64, scratch_operands = 0 : i64, tpu.core_type = #tpu.core_type<tc>} {
    %c0 = arith.constant 0 : index
    %c0_0 = arith.constant 0 : index
    %0 = vector.load %arg0[%c0, %c0_0] : memref<8x128xf32, #tpu.memory_space<vmem>>, vector<8x128xf32>
    %c1_i32 = arith.constant 1 : i32
    %1 = tpu.dynamic_rotate %0 by %c1_i32 dim 1 : vector<8x128xf32>, i32 -> vector<8x128xf32>
    %c0_1 = arith.constant 0 : index
    %c0_2 = arith.constant 0 : index
    %2 = vector.load %arg1[%c0_1, %c0_2] : memref<8x128xf32, #tpu.memory_space<vmem>>, vector<8x128xf32>
    tpu.vector_store %arg1[%c0_1, %c0_2], %1 {strides = array<i32>} : memref<8x128xf32, #tpu.memory_space<vmem>>, vector<8x128xf32>,
    return
  }
}

</mosaic_0001>

<llo_original>
// kernel: tpu_custom_call.1
$region0: #{tpu_custom_call.1}
  #allocation0 [shape = 'u32[]', space=smem, size = 0x4, offset = 0x4, fixed_abs, tag = 'smem constant byte address 0x4 - core index']
  #allocation1 [shape = 'u32[144,128]{1,0:T(1,128)}', space=vmem, size = 0x12000, scoped, tag = 'internal scratch']
  %s0 = inlined_call_operand.hbm [shape: f32[8,128], index: 0, kind: input, shape index: {}]
  %s1 = inlined_call_operand.hbm [shape: f32[8,128], index: 1, kind: output, shape index: {}]
  %s2 = sld [smem:[#allocation0]]
  $region18: #{tpu_custom_call.1} parent=0
    _
  %s4 = ssub.s32 1, %s2
  %s5 = scalar_select 0, %s4, %s2
  $region1: #{tpu_custom_call.1} parent=0
    #allocation2 [shape = 'u8[4096]{0}', space=vmem, size = 0x1000, scoped, tag = 'input window, operand 0, single buffered']
    #allocation3 [shape = 's32[1]{0}', space=sflag, size = 0x4, scoped, tag = 'scoped memory for tpu_custom_call.1']
    #allocation4 [shape = 's32[1]{0}', space=sflag, size = 0x4, scoped, tag = 'scoped memory for tpu_custom_call.1']
    #allocation5 [shape = 'u8[4096]{0}', space=vmem, size = 0x1000, scoped, tag = 'output window, operand 0, single buffered']
    %6 = vsyncpa [#allocation3], 0
    %7 = vsyncpa [#allocation4], 0
    // Predicated region
    $region2: #{tpu_custom_call.1} parent=1 // pred_check
      _
    $region3: #{tpu_custom_call.1} parent=1 // pred_check_branch
      %9 = sbr.rel (0) target = $region5
    $region4: #{tpu_custom_call.1} parent=1 // pred_region
      %s11 = ssub.s32 128, 128
      %12 = vsyncadd [#allocation3], %s11
      %s14 = sshll.u32 [#allocation2], 4
      %s15 = int_to_ptr.vmem [resolvable:$true] %s14
      %17 = dma.hbm_to_vmem [thread:$0]  %s0, 128, %s15, [#allocation3]
    $region5: #{tpu_custom_call.1} parent=1 // pred_fallthru
      _
    // Predicated region
    $region6: #{tpu_custom_call.1} parent=1 // pred_check
      _
    $region7: #{tpu_custom_call.1} parent=1 // pred_check_branch
      %19 = sbr.rel (0) target = $region9
    $region8: #{tpu_custom_call.1} parent=1 // pred_region
      %20 = dma.done [#allocation3], 128
    $region9: #{tpu_custom_call.1} parent=1 // pred_fallthru
      _
    %v21 = vld [vmem:[#allocation2] sm:$0xff]
    %22 = vrot.lane.b32.xlu0 %v21, 1
    %v23 = vpop.permute.xlu0 %22
    %24 = vst [vmem:[#allocation5] sm:$0xff] %v23
    // Predicated region
    $region10: #{tpu_custom_call.1} parent=1 // pred_check
      _
    $region11: #{tpu_custom_call.1} parent=1 // pred_check_branch
      %26 = sbr.rel (0) target = $region13
    $region12: #{tpu_custom_call.1} parent=1 // pred_region
      %s28 = ssub.s32 128, 128
      %29 = vsyncadd [#allocation4], %s28
      %s31 = sshll.u32 [#allocation5], 4
      %s32 = int_to_ptr.vmem [resolvable:$true] %s31
      %34 = dma.vmem_to_hbm [thread:$0]  %s32, 128, %s1, [#allocation4]
    $region13: #{tpu_custom_call.1} parent=1 // pred_fallthru
      _
    // Predicated region
    $region14: #{tpu_custom_call.1} parent=1 // pred_check
      _
    $region15: #{tpu_custom_call.1} parent=1 // pred_check_branch
      %36 = sbr.rel (0) target = $region17
    $region16: #{tpu_custom_call.1} parent=1 // pred_region
      %37 = dma.done [#allocation4], 128
    $region17: #{tpu_custom_call.1} parent=1 // pred_fallthru
      _
    %38 = vsyncpa [#allocation3], 1
    %39 = vsyncpa [#allocation4], 1

</llo_original>
